<compile_context>
chip_gen: v6e
topology: v6e:2x2x1
jax: 0.10.0
libtpu: 0.0.40
codegen_flags: <defaults>
</compile_context>

<pallas_src>
import functools
import math

import jax
import jax.numpy as jnp
from jax import lax
from jax.experimental import pallas as pl
from jax.experimental.pallas import tpu as pltpu


def _arcface_kernel(gt_ref, emb_ref, wt_ref, nll_ref, valid_ref,
                    en_scr, m_scr, s_scr, t_scr, *,
                    block_n, block_c, scale, cos_m, sin_m, th,
                    easy_margin, mxu_dtype):
    j = pl.program_id(1)
    nc = pl.num_programs(1)

    # ---- per-row-tile init (first class tile) --------------------------------
    @pl.when(j == 0)
    def _():
        # Row L2-normalization of the embedding tile (F.normalize, eps=1e-12),
        # done once per row tile; rsqrt runs on the EUP slot.
        emb = emb_ref[...].astype(jnp.float32)                      # (block_n, E)
        ss = jnp.sum(emb * emb, axis=1, keepdims=True)
        en_scr[...] = (emb * lax.rsqrt(jnp.maximum(ss, 1e-24))).astype(mxu_dtype)
        m_scr[...] = jnp.full((block_n, 1), -jnp.inf, dtype=jnp.float32)
        s_scr[...] = jnp.zeros((block_n, 1), dtype=jnp.float32)
        t_scr[...] = jnp.zeros((block_n, 1), dtype=jnp.float32)

    # ---- streamed class tile: scaled cosine logits on the MXU ----------------
    # wt_ref holds scale * normalize(W)^T, so z == scale * cos(theta).
    z = jnp.dot(en_scr[...], wt_ref[...],
                preferred_element_type=jnp.float32)                 # (block_n, block_c)

    # Online softmax (running max / running sum-exp) over the class axis.
    m_prev = m_scr[...]
    m_new = jnp.maximum(m_prev, jnp.max(z, axis=1, keepdims=True))
    s_scr[...] = (s_scr[...] * jnp.exp(m_prev - m_new)
                  + jnp.sum(jnp.exp(z - m_new), axis=1, keepdims=True))
    m_scr[...] = m_new

    # Target-class logit: the label falls in exactly one class tile.
    gt_local = gt_ref[...] - j * block_c                            # (block_n, 1)
    onehot = (lax.broadcasted_iota(jnp.int32, (block_n, block_c), 1) == gt_local)
    t_scr[...] += jnp.sum(jnp.where(onehot, z, 0.0), axis=1, keepdims=True)

    # ---- finalize (last class tile): margin on the target logit only ---------
    @pl.when(j == nc - 1)
    def _():
        zt = t_scr[...]                                             # scale*cos(theta_t)
        tc = jnp.clip(zt * (1.0 / scale), -1.0 + 1e-7, 1.0 - 1e-7)
        if easy_margin:
            valid = jnp.ones_like(tc)
        else:
            # Row kept iff acos(tc) + margin <= pi  <=>  tc >= cos(pi - margin).
            valid = (tc >= th).astype(jnp.float32)
        t_sin = jnp.sqrt(jnp.maximum(1.0 - tc * tc, 0.0))           # sin(theta_t) >= 0
        z_phi = scale * (tc * cos_m - t_sin * sin_m)                # scale*cos(theta_t+m)
        m = m_scr[...]
        # Swap the target's exp(zt - m) term for exp(z_phi - m) in the sum-exp.
        s = s_scr[...] - jnp.exp(zt - m) + jnp.exp(z_phi - m)
        s = jnp.maximum(s, 1e-30)                                   # fp-cancellation guard
        nll = valid * ((m + jnp.log(s)) - z_phi)                    # (block_n, 1)
        # Lane-densify the (block_n, 1) columns into (1, block_n) output rows
        # with a masked sublane reduce (diagonal pick; VPU/XLU slots).
        eye = (lax.broadcasted_iota(jnp.int32, (block_n, block_n), 0) ==
               lax.broadcasted_iota(jnp.int32, (block_n, block_n), 1))
        nll_ref[...] = jnp.sum(jnp.where(eye, nll, 0.0), axis=0, keepdims=True)
        valid_ref[...] = jnp.sum(jnp.where(eye, valid, 0.0), axis=0, keepdims=True)


def _pick_block(dim, target, quantum):
    """Largest block <= target that divides `dim` and is a multiple of
    `quantum` (TPU lane tiling); falls back to the full dim (always legal)."""
    if dim <= target:
        return dim
    b = (target // quantum) * quantum
    while b >= quantum:
        if dim % b == 0:
            return b
        b -= quantum
    return dim


def arcface_loss(embedding, ground_truth, weight, *, scale=64.0, margin=0.5,
                 easy_margin=False, block_n=None, block_c=None,
                 mxu_dtype=jnp.bfloat16, weight_buffer_count=None,
                 vmem_limit_bytes=48 * 1024 * 1024):
    """ArcFace loss.  embedding: (N, E), ground_truth: (N,) int, weight: (C, E).
    Returns scalar f32 loss: mean NLL over rows whose theta + margin <= pi,
    matching the PyTorch forward (a batch with zero valid rows returns 0
    instead of NaN)."""
    N, E = embedding.shape
    C, E2 = weight.shape
    assert E == E2

    if block_n is None:
        block_n = _pick_block(N, 256, 128)   # 256 rows feed the 256x256 MXU (v6e/v7x)
    if block_c is None:
        block_c = _pick_block(C, 2048, 128)  # streamed weight tile (E, block_c)
    assert N % block_n == 0 and C % block_c == 0
    assert block_n == N or block_n % 128 == 0   # lane-dense (1, block_n) outputs
    assert block_c == C or block_c % 128 == 0

    cos_m = math.cos(margin)
    sin_m = math.sin(margin)
    th = math.cos(math.pi - margin)

    # Pre-normalize + pre-transpose + pre-scale the class weights once
    # (parameter-side work hoisted out of the grid): (C, E) -> scale * W_n^T.
    w = weight.astype(jnp.float32)
    w_n = w * lax.rsqrt(jnp.maximum(jnp.sum(w * w, axis=1, keepdims=True), 1e-24))
    w_t = (float(scale) * jnp.transpose(w_n)).astype(mxu_dtype)     # (E, C)

    gt2d = ground_truth.astype(jnp.int32).reshape(N, 1)

    kernel = functools.partial(
        _arcface_kernel, block_n=block_n, block_c=block_c, scale=float(scale),
        cos_m=cos_m, sin_m=sin_m, th=th, easy_margin=bool(easy_margin),
        mxu_dtype=mxu_dtype)

    wt_spec_kwargs = {}
    if weight_buffer_count is not None:   # e.g. 3 on v5e if the weight DMA is exposed
        wt_spec_kwargs["pipeline_mode"] = pl.Buffered(weight_buffer_count)

    nll, valid = pl.pallas_call(
        kernel,
        out_shape=(jax.ShapeDtypeStruct((1, N), jnp.float32),
                   jax.ShapeDtypeStruct((1, N), jnp.float32)),
        grid_spec=pltpu.PrefetchScalarGridSpec(
            num_scalar_prefetch=0,
            grid=(N // block_n, C // block_c),
            in_specs=[
                pl.BlockSpec((block_n, 1), lambda i, j: (i, 0)),    # labels (per row tile)
                pl.BlockSpec((block_n, E), lambda i, j: (i, 0)),    # embedding tile
                pl.BlockSpec((E, block_c), lambda i, j: (0, j),     # streamed scale*W_n^T
                             **wt_spec_kwargs),
            ],
            out_specs=[pl.BlockSpec((1, block_n), lambda i, j: (0, i)),
                       pl.BlockSpec((1, block_n), lambda i, j: (0, i))],
            scratch_shapes=[
                pltpu.VMEM((block_n, E), mxu_dtype),     # normalized embedding
                pltpu.VMEM((block_n, 1), jnp.float32),   # running max
                pltpu.VMEM((block_n, 1), jnp.float32),   # running sum-exp
                pltpu.VMEM((block_n, 1), jnp.float32),   # running target logit
            ]),
        compiler_params=pltpu.CompilerParams(
            dimension_semantics=("parallel", "arbitrary"),
            vmem_limit_bytes=vmem_limit_bytes),
    )(gt2d, embedding, w_t)

    # Tiny epilogue: masked mean over valid rows (cross-row-tile scalar reduce,
    # guarded against count == 0).
    cnt = jnp.sum(valid)
    return jnp.sum(nll) / jnp.maximum(cnt, 1.0)


def arcface_ref(embedding, gt, weight, *, scale=64.0, margin=0.5,
                easy_margin=False):
    """Pure-JAX reference mirroring the PyTorch forward semantics."""
    eps = 1e-12
    emb = embedding.astype(jnp.float32)
    w = weight.astype(jnp.float32)
    emb_n = emb / jnp.maximum(jnp.linalg.norm(emb, axis=1, keepdims=True), eps)
    w_n = w / jnp.maximum(jnp.linalg.norm(w, axis=1, keepdims=True), eps)
    cos = jnp.clip(jnp.matmul(emb_n, w_n.T, precision=lax.Precision.HIGHEST),
                   -1.0 + 1e-7, 1.0 - 1e-7)
    onehot = jax.nn.one_hot(gt, cos.shape[1], dtype=jnp.float32)
    target_cos = jnp.sum(cos * onehot, axis=1)
    if easy_margin:
        valid = jnp.ones_like(target_cos)
    else:
        valid = (target_cos >= math.cos(math.pi - margin)).astype(jnp.float32)
    theta = jnp.arccos(cos)
    logits = jnp.cos(theta + margin * onehot) * scale
    logp = jax.nn.log_softmax(logits, axis=1)
    nll = -jnp.sum(logp * onehot, axis=1)
    return jnp.sum(nll * valid) / jnp.maximum(jnp.sum(valid), 1.0)


if __name__ == "__main__":
    def make_case(key, N, E, C):
        k_w, k_emb, k_gt = jax.random.split(key, 3)
        bound = math.sqrt(6.0 / (C + E))                    # xavier_uniform_
        weight = jax.random.uniform(k_w, (C, E), jnp.float32, -bound, bound)
        embedding = jax.random.normal(k_emb, (N, E), jnp.float32)
        gt = jax.random.randint(k_gt, (N,), 0, C, dtype=jnp.int32)
        return embedding, gt, weight

    scale, margin = 64.0, 0.5
    k1, k2 = jax.random.split(jax.random.PRNGKey(0))

    # Case 1: small single-tile shapes (grid = (1, 1)).
    emb1, gt1, w1 = make_case(k1, 16, 32, 128)
    ref1 = arcface_ref(emb1, gt1, w1, scale=scale, margin=margin)

    loss1_f32 = jax.block_until_ready(
        arcface_loss(emb1, gt1, w1, scale=scale, margin=margin,
                     mxu_dtype=jnp.float32))
    assert jnp.isfinite(loss1_f32), "f32 loss not finite"
    assert jnp.allclose(loss1_f32, ref1, rtol=5e-3, atol=1e-1), (loss1_f32, ref1)

    loss1_bf16 = jax.block_until_ready(                      # bf16 MXU default path
        arcface_loss(emb1, gt1, w1, scale=scale, margin=margin))
    assert jnp.isfinite(loss1_bf16), "bf16 loss not finite"
    assert jnp.allclose(loss1_bf16, ref1, rtol=5e-2, atol=5e-1), (loss1_bf16, ref1)

    # Case 2: exercises row tiling + class-streamed online softmax (grid (2, 4)).
    emb2, gt2, w2 = make_case(k2, 256, 128, 1024)
    ref2 = arcface_ref(emb2, gt2, w2, scale=scale, margin=margin)

    loss2_f32 = jax.block_until_ready(
        arcface_loss(emb2, gt2, w2, scale=scale, margin=margin,
                     mxu_dtype=jnp.float32, block_n=128, block_c=256))
    assert jnp.isfinite(loss2_f32), "tiled f32 loss not finite"
    assert jnp.allclose(loss2_f32, ref2, rtol=5e-3, atol=1e-1), (loss2_f32, ref2)

    loss2_bf16 = jax.block_until_ready(
        arcface_loss(emb2, gt2, w2, scale=scale, margin=margin,
                     block_n=128, block_c=256))
    assert jnp.isfinite(loss2_bf16), "tiled bf16 loss not finite"
    assert jnp.allclose(loss2_bf16, ref2, rtol=5e-2, atol=5e-1), (loss2_bf16, ref2)

    # easy_margin branch.
    ref2e = arcface_ref(emb2, gt2, w2, scale=scale, margin=margin, easy_margin=True)
    loss2e = jax.block_until_ready(
        arcface_loss(emb2, gt2, w2, scale=scale, margin=margin, easy_margin=True,
                     mxu_dtype=jnp.float32, block_n=128, block_c=256))
    assert jnp.allclose(loss2e, ref2e, rtol=5e-3, atol=1e-1), (loss2e, ref2e)

    print("KERNEL_OK")
</pallas_src>

<mosaic_0001>
module attributes {stable_mosaic.version = 11 : i64} {
  func.func @_arcface_kernel(%arg0: i32, %arg1: i32, %arg2: memref<16x1xi32, #tpu.memory_space<vmem>>, %arg3: memref<16x32xf32, #tpu.memory_space<vmem>>, %arg4: memref<32x128xf32, #tpu.memory_space<vmem>>, %arg5: memref<1x16xf32, #tpu.memory_space<vmem>>, %arg6: memref<1x16xf32, #tpu.memory_space<vmem>>, %arg7: memref<16x32xf32, #tpu.memory_space<vmem>>, %arg8: memref<16x1xf32, #tpu.memory_space<vmem>>, %arg9: memref<16x1xf32, #tpu.memory_space<vmem>>, %arg10: memref<16x1xf32, #tpu.memory_space<vmem>>) attributes {dimension_semantics = [#tpu.dimension_semantics<parallel>, #tpu.dimension_semantics<arbitrary>], iteration_bounds = array<i64: 1, 1>, scalar_prefetch = 0 : i64, scratch_operands = 4 : i64, tpu.core_type = #tpu.core_type<tc>, window_params = [{transform_indices = @transform_0, window_bounds = array<i64: 16, 1>}, {transform_indices = @transform_1, window_bounds = array<i64: 16, 32>}, {transform_indices = @transform_2, window_bounds = array<i64: 32, 128>}, {transform_indices = @transform_3, window_bounds = array<i64: 1, 16>}, {transform_indices = @transform_4, window_bounds = array<i64: 1, 16>}]} {
    %c0_i32 = arith.constant 0 : i32
    %0 = arith.cmpi eq, %arg1, %c0_i32 : i32
    %1 = arith.extui %0 : i1 to i32
    %c0_i32_0 = arith.constant 0 : i32
    %2 = arith.cmpi ne, %1, %c0_i32_0 : i32
    scf.if %2 {
      %c0_24 = arith.constant 0 : index
      %c0_25 = arith.constant 0 : index
      %39 = vector.load %arg3[%c0_24, %c0_25] : memref<16x32xf32, #tpu.memory_space<vmem>>, vector<16x32xf32>
      %40 = arith.mulf %39, %39 : vector<16x32xf32>
      %cst_26 = arith.constant dense<0.000000e+00> : vector<16xf32>
      %41 = vector.multi_reduction <add>, %40, %cst_26 [1] : vector<16x32xf32> to vector<16xf32>
      %42 = vector.shape_cast %41 : vector<16xf32> to vector<16x1xf32>
      %cst_27 = arith.constant 1.000000e-24 : f32
      %43 = vector.broadcast %cst_27 : f32 to vector<16x1xf32>
      %44 = arith.maximumf %42, %43 : vector<16x1xf32>
      %45 = math.rsqrt %44 : vector<16x1xf32>
      %46 = vector.broadcast %45 : vector<16x1xf32> to vector<16x32xf32>
      %47 = arith.mulf %39, %46 : vector<16x32xf32>
      %c0_28 = arith.constant 0 : index
      %c0_29 = arith.constant 0 : index
      %48 = vector.load %arg7[%c0_28, %c0_29] : memref<16x32xf32, #tpu.memory_space<vmem>>, vector<16x32xf32>
      tpu.vector_store %arg7[%c0_28, %c0_29], %47 {strides = array<i32>} : memref<16x32xf32, #tpu.memory_space<vmem>>, vector<16x32xf32>,
      %cst_30 = arith.constant 0xFF800000 : f32
      %49 = vector.broadcast %cst_30 : f32 to vector<16x1xf32>
      %c0_31 = arith.constant 0 : index
      %c0_32 = arith.constant 0 : index
      %50 = vector.load %arg8[%c0_31, %c0_32] : memref<16x1xf32, #tpu.memory_space<vmem>>, vector<16x1xf32>
      tpu.vector_store %arg8[%c0_31, %c0_32], %49 {strides = array<i32>} : memref<16x1xf32, #tpu.memory_space<vmem>>, vector<16x1xf32>,
      %cst_33 = arith.constant 0.000000e+00 : f32
      %51 = vector.broadcast %cst_33 : f32 to vector<16x1xf32>
      %c0_34 = arith.constant 0 : index
      %c0_35 = arith.constant 0 : index
      %52 = vector.load %arg9[%c0_34, %c0_35] : memref<16x1xf32, #tpu.memory_space<vmem>>, vector<16x1xf32>
      tpu.vector_store %arg9[%c0_34, %c0_35], %51 {strides = array<i32>} : memref<16x1xf32, #tpu.memory_space<vmem>>, vector<16x1xf32>,
      %cst_36 = arith.constant 0.000000e+00 : f32
      %53 = vector.broadcast %cst_36 : f32 to vector<16x1xf32>
      %c0_37 = arith.constant 0 : index
      %c0_38 = arith.constant 0 : index
      %54 = vector.load %arg10[%c0_37, %c0_38] : memref<16x1xf32, #tpu.memory_space<vmem>>, vector<16x1xf32>
      tpu.vector_store %arg10[%c0_37, %c0_38], %53 {strides = array<i32>} : memref<16x1xf32, #tpu.memory_space<vmem>>, vector<16x1xf32>,
    } else {
    }
    %c0 = arith.constant 0 : index
    %c0_1 = arith.constant 0 : index
    %3 = vector.load %arg7[%c0, %c0_1] : memref<16x32xf32, #tpu.memory_space<vmem>>, vector<16x32xf32>
    %c0_2 = arith.constant 0 : index
    %c0_3 = arith.constant 0 : index
    %4 = vector.load %arg4[%c0_2, %c0_3] : memref<32x128xf32, #tpu.memory_space<vmem>>, vector<32x128xf32>
    %cst = arith.constant dense<0.000000e+00> : vector<16x128xf32>
    %5 = tpu.matmul %3, %4, %cst {dimension_numbers = #tpu.dot_dimension_numbers<[1], [0], [0], [1], [0, 0, 1, 1], [], []>} : vector<16x32xf32>, vector<32x128xf32>, vector<16x128xf32> -> vector<16x128xf32>
    %c0_4 = arith.constant 0 : index
    %c0_5 = arith.constant 0 : index
    %6 = vector.load %arg8[%c0_4, %c0_5] : memref<16x1xf32, #tpu.memory_space<vmem>>, vector<16x1xf32>
    %cst_6 = arith.constant dense<0xFF800000> : vector<16xf32>
    %7 = vector.multi_reduction <maximumf>, %5, %cst_6 [1] : vector<16x128xf32> to vector<16xf32>
    %8 = vector.shape_cast %7 : vector<16xf32> to vector<16x1xf32>
    %9 = arith.maximumf %6, %8 : vector<16x1xf32>
    %c0_7 = arith.constant 0 : index
    %c0_8 = arith.constant 0 : index
    %10 = vector.load %arg9[%c0_7, %c0_8] : memref<16x1xf32, #tpu.memory_space<vmem>>, vector<16x1xf32>
    %11 = arith.subf %6, %9 : vector<16x1xf32>
    %12 = math.exp %11 : vector<16x1xf32>
    %13 = arith.mulf %10, %12 : vector<16x1xf32>
    %14 = vector.broadcast %9 : vector<16x1xf32> to vector<16x128xf32>
    %15 = arith.subf %5, %14 : vector<16x128xf32>
    %16 = math.exp %15 : vector<16x128xf32>
    %cst_9 = arith.constant dense<0.000000e+00> : vector<16xf32>
    %17 = vector.multi_reduction <add>, %16, %cst_9 [1] : vector<16x128xf32> to vector<16xf32>
    %18 = vector.shape_cast %17 : vector<16xf32> to vector<16x1xf32>
    %19 = arith.addf %13, %18 : vector<16x1xf32>
    %c0_10 = arith.constant 0 : index
    %c0_11 = arith.constant 0 : index
    %20 = vector.load %arg9[%c0_10, %c0_11] : memref<16x1xf32, #tpu.memory_space<vmem>>, vector<16x1xf32>
    tpu.vector_store %arg9[%c0_10, %c0_11], %19 {strides = array<i32>} : memref<16x1xf32, #tpu.memory_space<vmem>>, vector<16x1xf32>,
    %c0_12 = arith.constant 0 : index
    %c0_13 = arith.constant 0 : index
    %21 = vector.load %arg8[%c0_12, %c0_13] : memref<16x1xf32, #tpu.memory_space<vmem>>, vector<16x1xf32>
    tpu.vector_store %arg8[%c0_12, %c0_13], %9 {strides = array<i32>} : memref<16x1xf32, #tpu.memory_space<vmem>>, vector<16x1xf32>,
    %c0_14 = arith.constant 0 : index
    %c0_15 = arith.constant 0 : index
    %22 = vector.load %arg2[%c0_14, %c0_15] : memref<16x1xi32, #tpu.memory_space<vmem>>, vector<16x1xi32>
    %c128_i32 = arith.constant 128 : i32
    %23 = arith.muli %arg1, %c128_i32 : i32
    %24 = vector.broadcast %23 : i32 to vector<16x1xi32>
    %25 = arith.subi %22, %24 : vector<16x1xi32>
    %26 = tpu.iota {dimensions = array<i32: 1>} : vector<16x128xi32>
    %27 = vector.broadcast %25 : vector<16x1xi32> to vector<16x128xi32>
    %28 = arith.cmpi eq, %26, %27 : vector<16x128xi32>
    %c0_16 = arith.constant 0 : index
    %c0_17 = arith.constant 0 : index
    %29 = vector.load %arg10[%c0_16, %c0_17] : memref<16x1xf32, #tpu.memory_space<vmem>>, vector<16x1xf32>
    %cst_18 = arith.constant 0.000000e+00 : f32
    %30 = vector.broadcast %cst_18 : f32 to vector<16x128xf32>
    %31 = arith.select %28, %5, %30 : vector<16x128xi1>, vector<16x128xf32>
    %cst_19 = arith.constant dense<0.000000e+00> : vector<16xf32>
    %32 = vector.multi_reduction <add>, %31, %cst_19 [1] : vector<16x128xf32> to vector<16xf32>
    %33 = vector.shape_cast %32 : vector<16xf32> to vector<16x1xf32>
    %34 = arith.addf %29, %33 : vector<16x1xf32>
    %c0_20 = arith.constant 0 : index
    %c0_21 = arith.constant 0 : index
    %35 = vector.load %arg10[%c0_20, %c0_21] : memref<16x1xf32, #tpu.memory_space<vmem>>, vector<16x1xf32>
    tpu.vector_store %arg10[%c0_20, %c0_21], %34 {strides = array<i32>} : memref<16x1xf32, #tpu.memory_space<vmem>>, vector<16x1xf32>,
    %c0_i32_22 = arith.constant 0 : i32
    %36 = arith.cmpi eq, %arg1, %c0_i32_22 : i32
    %37 = arith.extui %36 : i1 to i32
    %c0_i32_23 = arith.constant 0 : i32
    %38 = arith.cmpi ne, %37, %c0_i32_23 : i32
    scf.if %38 {
      %c0_24 = arith.constant 0 : index
      %c0_25 = arith.constant 0 : index
      %39 = vector.load %arg10[%c0_24, %c0_25] : memref<16x1xf32, #tpu.memory_space<vmem>>, vector<16x1xf32>
      %cst_26 = arith.constant 1.562500e-02 : f32
      %40 = vector.broadcast %cst_26 : f32 to vector<16x1xf32>
      %41 = arith.mulf %39, %40 : vector<16x1xf32>
      %cst_27 = arith.constant -0.99999988 : f32
      %cst_28 = arith.constant 0.99999988 : f32
      %42 = vector.broadcast %cst_27 : f32 to vector<16x1xf32>
      %43 = arith.maximumf %42, %41 : vector<16x1xf32>
      %44 = vector.broadcast %cst_28 : f32 to vector<16x1xf32>
      %45 = arith.minimumf %44, %43 : vector<16x1xf32>
      %cst_29 = arith.constant -0.87758255 : f32
      %46 = vector.broadcast %cst_29 : f32 to vector<16x1xf32>
      %47 = arith.cmpf oge, %45, %46 : vector<16x1xf32>
      %48 = arith.extui %47 : vector<16x1xi1> to vector<16x1xi32>
      %49 = arith.sitofp %48 : vector<16x1xi32> to vector<16x1xf32>
      %50 = arith.mulf %45, %45 : vector<16x1xf32>
      %cst_30 = arith.constant 1.000000e+00 : f32
      %51 = vector.broadcast %cst_30 : f32 to vector<16x1xf32>
      %52 = arith.subf %51, %50 : vector<16x1xf32>
      %cst_31 = arith.constant 0.000000e+00 : f32
      %53 = vector.broadcast %cst_31 : f32 to vector<16x1xf32>
      %54 = arith.maximumf %52, %53 : vector<16x1xf32>
      %55 = math.sqrt %54 : vector<16x1xf32>
      %cst_32 = arith.constant 0.87758255 : f32
      %56 = vector.broadcast %cst_32 : f32 to vector<16x1xf32>
      %57 = arith.mulf %45, %56 : vector<16x1xf32>
      %cst_33 = arith.constant 0.47942555 : f32
      %58 = vector.broadcast %cst_33 : f32 to vector<16x1xf32>
      %59 = arith.mulf %55, %58 : vector<16x1xf32>
      %60 = arith.subf %57, %59 : vector<16x1xf32>
      %cst_34 = arith.constant 6.400000e+01 : f32
      %61 = vector.broadcast %cst_34 : f32 to vector<16x1xf32>
      %62 = arith.mulf %61, %60 : vector<16x1xf32>
      %c0_35 = arith.constant 0 : index
      %c0_36 = arith.constant 0 : index
      %63 = vector.load %arg8[%c0_35, %c0_36] : memref<16x1xf32, #tpu.memory_space<vmem>>, vector<16x1xf32>
      %c0_37 = arith.constant 0 : index
      %c0_38 = arith.constant 0 : index
      %64 = vector.load %arg9[%c0_37, %c0_38] : memref<16x1xf32, #tpu.memory_space<vmem>>, vector<16x1xf32>
      %65 = arith.subf %39, %63 : vector<16x1xf32>
      %66 = math.exp %65 : vector<16x1xf32>
      %67 = arith.subf %64, %66 : vector<16x1xf32>
      %68 = arith.subf %62, %63 : vector<16x1xf32>
      %69 = math.exp %68 : vector<16x1xf32>
      %70 = arith.addf %67, %69 : vector<16x1xf32>
      %cst_39 = arith.constant 1.000000e-30 : f32
      %71 = vector.broadcast %cst_39 : f32 to vector<16x1xf32>
      %72 = arith.maximumf %70, %71 : vector<16x1xf32>
      %73 = math.log %72 : vector<16x1xf32>
      %74 = arith.addf %63, %73 : vector<16x1xf32>
      %75 = arith.subf %74, %62 : vector<16x1xf32>
      %76 = arith.mulf %49, %75 : vector<16x1xf32>
      %77 = tpu.iota {dimensions = array<i32: 0>} : vector<16x16xi32>
      %78 = tpu.iota {dimensions = array<i32: 1>} : vector<16x16xi32>
      %79 = arith.cmpi eq, %77, %78 : vector<16x16xi32>
      %cst_40 = arith.constant 0.000000e+00 : f32
      %80 = vector.shape_cast %76 : vector<16x1xf32> to vector<16x1xf32>
      %81 = vector.broadcast %80 : vector<16x1xf32> to vector<16x16xf32>
      %82 = vector.broadcast %cst_40 : f32 to vector<16x16xf32>
      %83 = arith.select %79, %81, %82 : vector<16x16xi1>, vector<16x16xf32>
      %cst_41 = arith.constant dense<0.000000e+00> : vector<16xf32>
      %84 = vector.multi_reduction <add>, %83, %cst_41 [0] : vector<16x16xf32> to vector<16xf32>
      %85 = vector.shape_cast %84 : vector<16xf32> to vector<1x16xf32>
      %c0_42 = arith.constant 0 : index
      %c0_43 = arith.constant 0 : index
      %86 = vector.load %arg5[%c0_42, %c0_43] : memref<1x16xf32, #tpu.memory_space<vmem>>, vector<1x16xf32>
      tpu.vector_store %arg5[%c0_42, %c0_43], %85 {strides = array<i32>} : memref<1x16xf32, #tpu.memory_space<vmem>>, vector<1x16xf32>,
      %cst_44 = arith.constant 0.000000e+00 : f32
      %87 = vector.shape_cast %49 : vector<16x1xf32> to vector<16x1xf32>
      %88 = vector.broadcast %87 : vector<16x1xf32> to vector<16x16xf32>
      %89 = vector.broadcast %cst_44 : f32 to vector<16x16xf32>
      %90 = arith.select %79, %88, %89 : vector<16x16xi1>, vector<16x16xf32>
      %cst_45 = arith.constant dense<0.000000e+00> : vector<16xf32>
      %91 = vector.multi_reduction <add>, %90, %cst_45 [0] : vector<16x16xf32> to vector<16xf32>
      %92 = vector.shape_cast %91 : vector<16xf32> to vector<1x16xf32>
      %c0_46 = arith.constant 0 : index
      %c0_47 = arith.constant 0 : index
      %93 = vector.load %arg6[%c0_46, %c0_47] : memref<1x16xf32, #tpu.memory_space<vmem>>, vector<1x16xf32>
      tpu.vector_store %arg6[%c0_46, %c0_47], %92 {strides = array<i32>} : memref<1x16xf32, #tpu.memory_space<vmem>>, vector<1x16xf32>,
    } else {
    }
    return
  }
  func.func @transform_0(%arg0: i32, %arg1: i32) -> (i32, i32) {
    %c0_i32 = arith.constant 0 : i32
    %c0_i32_0 = arith.constant 0 : i32
    return %arg0, %c0_i32 : i32, i32
  }
  func.func @transform_1(%arg0: i32, %arg1: i32) -> (i32, i32) {
    %c0_i32 = arith.constant 0 : i32
    %c0_i32_0 = arith.constant 0 : i32
    return %arg0, %c0_i32 : i32, i32
  }
  func.func @transform_2(%arg0: i32, %arg1: i32) -> (i32, i32) {
    %c0_i32 = arith.constant 0 : i32
    %c0_i32_0 = arith.constant 0 : i32
    return %c0_i32, %arg1 : i32, i32
  }
  func.func @transform_3(%arg0: i32, %arg1: i32) -> (i32, i32) {
    %c0_i32 = arith.constant 0 : i32
    %c0_i32_0 = arith.constant 0 : i32
    return %c0_i32, %arg0 : i32, i32
  }
  func.func @transform_4(%arg0: i32, %arg1: i32) -> (i32, i32) {
    %c0_i32 = arith.constant 0 : i32
    %c0_i32_0 = arith.constant 0 : i32
    return %c0_i32, %arg0 : i32, i32
  }
}

</mosaic_0001>

<llo_original>
// kernel: tpu_custom_call.1
$region0: #{tpu_custom_call.1}
  #allocation0 [shape = 'u32[]', space=smem, size = 0x4, offset = 0x4, fixed_abs, tag = 'smem constant byte address 0x4 - core index']
  #allocation1 [shape = 'u32[144,128]{1,0:T(1,128)}', space=vmem, size = 0x12000, scoped, tag = 'internal scratch']
  #allocation2 [shape = 'f32[16,32]{1,0:T(8,128)}', space=vmem, size = 0x2000, scoped, tag = 'scratch operand']
  #allocation3 [shape = 'f32[16,1]{1,0:T(8,128)}', space=vmem, size = 0x2000, scoped, tag = 'scratch operand']
  #allocation4 [shape = 'f32[16,1]{1,0:T(8,128)}', space=vmem, size = 0x2000, scoped, tag = 'scratch operand']
  #allocation5 [shape = 'f32[16,1]{1,0:T(8,128)}', space=vmem, size = 0x2000, scoped, tag = 'scratch operand']
  %s0 = inlined_call_operand.vmem [shape: s32[16,1], index: 0, kind: input, shape index: {}]
  %s1 = inlined_call_operand.vmem [shape: f32[16,32], index: 1, kind: input, shape index: {}]
  %s2 = inlined_call_operand.hbm [shape: f32[32,128], index: 2, kind: input, shape index: {}]
  %s3 = inlined_call_operand.hbm [shape: f32[1,16], index: 3, kind: output, shape index: {0}]
  %s4 = inlined_call_operand.hbm [shape: f32[1,16], index: 4, kind: output, shape index: {1}]
  %5 = xla_tuple %s3, %s4
  %s6 = sld [smem:[#allocation0]]
  $region42: #{tpu_custom_call.1} parent=0
    _
  %s8 = ssub.s32 1, %s6
  %s9 = scalar_select 0, %s8, %s6
  $region1: #{tpu_custom_call.1} parent=0
    #allocation6 [shape = 'u8[16384]{0}', space=vmem, size = 0x4000, scoped, tag = 'input window, operand 2, single buffered']
    #allocation7 [shape = 's32[1]{0}', space=sflag, size = 0x4, scoped, tag = 'scoped memory for tpu_custom_call.1']
    #allocation8 [shape = 's32[1]{0}', space=sflag, size = 0x4, scoped, tag = 'scoped memory for tpu_custom_call.1']
    #allocation9 [shape = 'u8[512]{0}', space=vmem, size = 0x400, scoped, tag = 'output window, operand 0, single buffered']
    #allocation10 [shape = 'u8[512]{0}', space=vmem, size = 0x400, scoped, tag = 'output window, operand 1, single buffered']
    #allocation11 [shape = 's32[1]{0}', space=sflag, size = 0x4, scoped, tag = 'scoped memory for tpu_custom_call.1']
    %10 = vsyncpa [#allocation7], 0
    %11 = vsyncpa [#allocation8], 0
    %12 = vsyncpa [#allocation11], 0
    // Predicated region
    $region2: #{tpu_custom_call.1} parent=1 // pred_check
      _
    $region3: #{tpu_custom_call.1} parent=1 // pred_check_branch
      %14 = sbr.rel (0) target = $region5
    $region4: #{tpu_custom_call.1} parent=1 // pred_region
      _
    $region5: #{tpu_custom_call.1} parent=1 // pred_fallthru
      _
    // Predicated region
    $region6: #{tpu_custom_call.1} parent=1 // pred_check
      _
    $region7: #{tpu_custom_call.1} parent=1 // pred_check_branch
      %16 = sbr.rel (0) target = $region9
    $region8: #{tpu_custom_call.1} parent=1 // pred_region
      _
    $region9: #{tpu_custom_call.1} parent=1 // pred_fallthru
      _
    // Predicated region
    $region10: #{tpu_custom_call.1} parent=1 // pred_check
      _
    $region11: #{tpu_custom_call.1} parent=1 // pred_check_branch
      %18 = sbr.rel (0) target = $region13
    $region12: #{tpu_custom_call.1} parent=1 // pred_region
      %s20 = ssub.s32 512, 512
      %21 = vsyncadd [#allocation7], %s20
      %s22 = sshll.u32 [#allocation6], 4
      %s23 = int_to_ptr.vmem [resolvable:$true] %s22
      %28 = dma.hbm_to_vmem [thread:$0]  %s2, 512, %s23, [#allocation7], 128, 128, 8
    $region13: #{tpu_custom_call.1} parent=1 // pred_fallthru
      _
    // Predicated region
    $region14: #{tpu_custom_call.1} parent=1 // pred_check
      _
    $region15: #{tpu_custom_call.1} parent=1 // pred_check_branch
      %30 = sbr.rel (0) target = $region17
    $region16: #{tpu_custom_call.1} parent=1 // pred_region
      %31 = dma.done [#allocation7], 512
    $region17: #{tpu_custom_call.1} parent=1 // pred_fallthru
      _
    %p32 = scmp.eq.s32.totalorder 0, 0
    // Predicated region
    $region18: #{tpu_custom_call.1} parent=1 // pred_check
      %p33 = pneg %p32
    $region19: #{tpu_custom_call.1} parent=1 // pred_check_branch
      %35 = sbr.rel (%p33) target = $region21
    $region20: #{tpu_custom_call.1} parent=1 // pred_region
      %v36 = vld [vmem:[%s1] sm:$0xff]
      %v37 = vld [vmem:[%s1 + $0x8] sm:$0xff]
      %v38 = vmul.f32 %v36, %v36
      %v39 = vmul.f32 %v37, %v37
      %vm40 = vcmask 261120
      %v41 = vsel %vm40, %v38, 0.0
      %42 = vadd.xlane.f32.xlu0 %v41
      %v43 = vpop.xlane.xlu0 %42
      %v44 = vsel %vm40, %v39, 0.0
      %45 = vadd.xlane.f32.xlu0 %v44
      %v46 = vpop.xlane.xlu0 %45
      %v47 = vmax.f32 %v43, 1e-24
      %v48 = vmax.f32 %v46, 1e-24
      %v49 = vrsqrt.pop %v47
      %v50 = vrsqrt.pop %v48
      %v51 = vmul.f32 %v36, %v49
      %v52 = vmul.f32 %v37, %v50
      %53 = vst.msk [vmem:[#allocation2] sm:$0xff] %vm40, %v51
      %54 = vst.msk [vmem:[#allocation2 + $0x8] sm:$0xff] %vm40, %v52
      %vm55 = vcmask 7168
      %56 = vst.msk [vmem:[#allocation3] sm:$0xff] %vm55, -inf
      %57 = vst.msk [vmem:[#allocation3 + $0x8] sm:$0xff] %vm55, -inf
      %58 = vst.msk [vmem:[#allocation4] sm:$0xff] %vm55, 0.0
      %59 = vst.msk [vmem:[#allocation4 + $0x8] sm:$0xff] %vm55, 0.0
      %60 = vst.msk [vmem:[#allocation5] sm:$0xff] %vm55, 0.0
      %61 = vst.msk [vmem:[#allocation5 + $0x8] sm:$0xff] %vm55, 0.0
    $region21: #{tpu_custom_call.1} parent=1 // pred_fallthru
      _
    %v62 = vld [vmem:[#allocation2] sm:$0xff]
    %v63 = vld [vmem:[#allocation2 + $0x8] sm:$0xff]
    %v64 = vld [vmem:[#allocation6] sm:$0xff]
    %v65 = vld [vmem:[#allocation6 + $0x8] sm:$0xff]
    %v66 = vld [vmem:[#allocation6 + $0x10] sm:$0xff]
    %v67 = vld [vmem:[#allocation6 + $0x18] sm:$0xff]
    %vm68 = vcmask 261120
    %v70 = vsel %vm68, %v62, 0
    %v73 = vsel %vm68, %v63, 0
    %75 = vmatprep.subr.mxu0 0.0
    %76 = vmatpush1.msra.mxu0 0.0
    %77 = vmatprep.subr.mxu0 0.0
    %78 = vmatpush1.msra.mxu0 0.0
    %79 = vmatprep.subr.mxu0 0.0
    %80 = vmatpush1.msra.mxu0 0.0
    %81 = vmatprep.subr.mxu0 0.0
    %82 = vmatpush1.msra.mxu0 0.0
    %83 = vmatprep.subr.mxu0 0.0
    %84 = vmatpush1.msra.mxu0 0.0
    %85 = vmatprep.subr.mxu0 0.0
    %86 = vmatpush1.msra.mxu0 0.0
    %87 = vmatprep.subr.mxu0 0.0
    %88 = vmatpush1.msra.mxu0 0.0
    %89 = vmatprep.subr.mxu0 0.0
    %90 = vmatpush1.msra.mxu0 0.0
    %91 = vmatprep.subr.mxu0 0.0
    %92 = vmatpush1.msra.mxu0 0.0
    %93 = vmatprep.subr.mxu0 0.0
    %94 = vmatpush1.msra.mxu0 0.0
    %95 = vmatprep.subr.mxu0 0.0
    %96 = vmatpush1.msra.mxu0 0.0
    %97 = vmatprep.subr.mxu0 0.0
    %98 = vmatpush1.msra.mxu0 0.0
    %99 = vmatprep.subr.mxu0 0.0
    %100 = vmatpush1.msra.mxu0 %v67
    %101 = vmatprep.subr.mxu0 0.0
    %102 = vmatpush1.msra.mxu0 %v66
    %103 = vmatprep.subr.mxu0 0.0
    %104 = vmatpush1.msra.mxu0 %v65
    %105 = vmatprep.subr.mxu0 0.0
    %106 = vmatpush1.msra.mxu0 %v64
    %107 = vmatprep.subr.mxu0 0.0
    %108 = vmatpush2.msra.mxu0 0.0
    %109 = vmatprep.subr.mxu0 0.0
    %110 = vmatpush2.msra.mxu0 0.0
    %111 = vmatprep.subr.mxu0 0.0
    %112 = vmatpush2.msra.mxu0 0.0
    %113 = vmatprep.subr.mxu0 0.0
    %114 = vmatpush2.msra.mxu0 0.0
    %115 = vmatprep.subr.mxu0 0.0
    %116 = vmatpush2.msra.mxu0 0.0
    %117 = vmatprep.subr.mxu0 0.0
    %118 = vmatpush2.msra.mxu0 0.0
    %119 = vmatprep.subr.mxu0 0.0
    %120 = vmatpush2.msra.mxu0 0.0
    %121 = vmatprep.subr.mxu0 0.0
    %122 = vmatpush2.msra.mxu0 0.0
    %123 = vmatprep.subr.mxu0 0.0
    %124 = vmatpush2.msra.mxu0 0.0
    %125 = vmatprep.subr.mxu0 0.0
    %126 = vmatpush2.msra.mxu0 0.0
    %127 = vmatprep.subr.mxu0 0.0
    %128 = vmatpush2.msra.mxu0 0.0
    %129 = vmatprep.subr.mxu0 0.0
    %130 = vmatpush2.msra.mxu0 0.0
    %131 = vmatprep.subr.mxu0 0.0
    %132 = vmatpush2.msra.mxu0 0.0
    %133 = vmatprep.subr.mxu0 0.0
    %134 = vmatpush2.msra.mxu0 0.0
    %135 = vmatprep.subr.mxu0 0.0
    %136 = vmatpush2.msra.mxu0 0.0
    %137 = vmatprep.subr.mxu0 0.0
    %138 = vmatpush2.msra.mxu0 0.0
    %139 = vmatprep.mubr.f32.mxu0 0.0
    %140 = vmatmul.mubr.f32.gmra.mxu0 %v70
    %v141 = vpop.f32.mrf.mxu0
    %v142 = vadd.f32 0.0, %v141
    %v143 = vpop.f32.mrf.mxu0
    %144 = vmatprep.mubr.f32.mxu0 0.0
    %145 = vmatmul.mubr.f32.gmra.mxu0 %v73
    %v146 = vpop.f32.mrf.mxu0
    %v147 = vadd.f32 0.0, %v146
    %v148 = vpop.f32.mrf.mxu0
    %149 = vdwg.mxu0
    %v150 = vld [vmem:[#allocation3] sm:$0xff]
    %v151 = vld [vmem:[#allocation3 + $0x8] sm:$0xff]
    %152 = vmax.xlane.f32.xlu0 %v142
    %v153 = vpop.xlane.xlu0 %152
    %154 = vmax.xlane.f32.xlu0 %v147
    %v155 = vpop.xlane.xlu0 %154
    %v156 = vmax.f32 %v150, %v153
    %v157 = vmax.f32 %v151, %v155
    %v158 = vld [vmem:[#allocation4] sm:$0xff]
    %v159 = vld [vmem:[#allocation4 + $0x8] sm:$0xff]
    %v160 = vsub.f32 %v150, %v156
    %v161 = vsub.f32 %v151, %v157
    %v162 = vmul.f32 %v160, 1.442695
    %v163 = vpow.pop %v162
    %v164 = vmul.f32 %v161, 1.442695
    %v165 = vpow.pop %v164
    %v166 = vmul.f32 %v158, %v163
    %v167 = vmul.f32 %v159, %v165
    %169 = vset.pattern.permute.xlu0 0
    %170 = vperm.xlu0 %169, %v156
    %v171 = vpop.permute.xlu0 %170
    %174 = vset.pattern.permute.xlu0 0
    %175 = vperm.xlu0 %174, %v157
    %v176 = vpop.permute.xlu0 %175
    %v178 = vsub.f32 %v142, %v171
    %v179 = vsub.f32 %v147, %v176
    %v180 = vmul.f32 %v178, 1.442695
    %v181 = vpow.pop %v180
    %v182 = vmul.f32 %v179, 1.442695
    %v183 = vpow.pop %v182
    %184 = vadd.xlane.f32.xlu0 %v181
    %v185 = vpop.xlane.xlu0 %184
    %186 = vadd.xlane.f32.xlu0 %v183
    %v187 = vpop.xlane.xlu0 %186
    %v188 = vadd.f32 %v166, %v185
    %v189 = vadd.f32 %v167, %v187
    %vm190 = vcmask 7168
    %191 = vst.msk [vmem:[#allocation4] sm:$0xff] %vm190, %v188
    %192 = vst.msk [vmem:[#allocation4 + $0x8] sm:$0xff] %vm190, %v189
    %193 = vst.msk [vmem:[#allocation3] sm:$0xff] %vm190, %v156
    %194 = vst.msk [vmem:[#allocation3 + $0x8] sm:$0xff] %vm190, %v157
    %v195 = vld [vmem:[%s0] sm:$0xff]
    %v196 = vld [vmem:[%s0 + $0x8] sm:$0xff]
    %s197 = smul.u32 0, 128
    %v198 = vstv %s197
    %v199 = vsub.s32 %v195, %v198
    %v200 = vsub.s32 %v196, %v198
    %v201 = vlaneseq
    %v202 = vand.u32 %v201, 127
    %203 = vset.pattern.permute.xlu0 0
    %204 = vperm.xlu0 %203, %v199
    %v205 = vpop.permute.xlu0 %204
    %206 = vset.pattern.permute.xlu0 0
    %207 = vperm.xlu0 %206, %v200
    %v208 = vpop.permute.xlu0 %207
    %vm209 = vcmp.eq.s32.totalorder %v202, %v205
    %vm210 = vcmp.eq.s32.totalorder %v202, %v208
    %v211 = vld [vmem:[#allocation5] sm:$0xff]
    %v212 = vld [vmem:[#allocation5 + $0x8] sm:$0xff]
    %v213 = vsel %vm209, %v142, 0.0
    %v214 = vsel %vm210, %v147, 0.0
    %215 = vadd.xlane.f32.xlu0 %v213
    %v216 = vpop.xlane.xlu0 %215
    %217 = vadd.xlane.f32.xlu0 %v214
    %v218 = vpop.xlane.xlu0 %217
    %v219 = vadd.f32 %v211, %v216
    %v220 = vadd.f32 %v212, %v218
    %221 = vst.msk [vmem:[#allocation5] sm:$0xff] %vm190, %v219
    %222 = vst.msk [vmem:[#allocation5 + $0x8] sm:$0xff] %vm190, %v220
    // Predicated region
    $region22: #{tpu_custom_call.1} parent=1 // pred_check
      %p223 = pneg %p32
    $region23: #{tpu_custom_call.1} parent=1 // pred_check_branch
      %225 = sbr.rel (%p223) target = $region25
    $region24: #{tpu_custom_call.1} parent=1 // pred_region
      %v226 = vld [vmem:[#allocation5] sm:$0xff]
      %v227 = vld [vmem:[#allocation5 + $0x8] sm:$0xff]
      %v228 = vmul.f32 %v226, 0.015625
      %v229 = vmul.f32 %v227, 0.015625
      %v230 = vmax.f32 %v228, -0.9999999
      %v231 = vmax.f32 %v229, -0.9999999
      %v232 = vmin.f32 %v230, 0.9999999
      %v233 = vmin.f32 %v231, 0.9999999
      %vm234 = vcmp.ge.f32.partialorder %v232, -0.87758255
      %vm235 = vcmp.ge.f32.partialorder %v233, -0.87758255
      %v236 = vsel %vm234, 1, 0
      %v237 = vsel %vm235, 1, 0
      %v238 = vcvt.s32.f32 %v236
      %v239 = vcvt.s32.f32 %v237
      %v240 = vmul.f32 %v232, %v232
      %v241 = vmul.f32 %v233, %v233
      %v242 = vsub.f32 1.0, %v240
      %v243 = vsub.f32 1.0, %v241
      %v244 = vmax.f32 %v242, 0.0
      %v245 = vmax.f32 %v243, 0.0
      %v246 = vrsqrt.pop %v244
      %v247 = vmul.f32 %v244, %v246
      %vm248 = vcmp.eq.f32.partialorder %v244, inf
      %v249 = vsel %vm248, %v244, %v247
      %vm250 = vcmp.eq.f32.partialorder %v244, 0.0
      %v251 = vand.u32 %v244, 2147483648
      %v252 = vsel %vm250, %v251, %v249
      %v253 = vrsqrt.pop %v245
      %v254 = vmul.f32 %v245, %v253
      %vm255 = vcmp.eq.f32.partialorder %v245, inf
      %v256 = vsel %vm255, %v245, %v254
      %vm257 = vcmp.eq.f32.partialorder %v245, 0.0
      %v258 = vand.u32 %v245, 2147483648
      %v259 = vsel %vm257, %v258, %v256
      %v260 = vmul.f32 %v232, 0.87758255
      %v261 = vmul.f32 %v233, 0.87758255
      %v262 = vmul.f32 %v252, 0.47942555
      %v263 = vmul.f32 %v259, 0.47942555
      %v264 = vsub.f32 %v260, %v262
      %v265 = vsub.f32 %v261, %v263
      %v266 = vmul.f32 %v264, 64.0
      %v267 = vmul.f32 %v265, 64.0
      %v268 = vld [vmem:[#allocation3] sm:$0xff]
      %v269 = vld [vmem:[#allocation3 + $0x8] sm:$0xff]
      %v270 = vld [vmem:[#allocation4] sm:$0xff]
      %v271 = vld [vmem:[#allocation4 + $0x8] sm:$0xff]
      %v272 = vsub.f32 %v226, %v268
      %v273 = vsub.f32 %v227, %v269
      %v274 = vmul.f32 %v272, 1.442695
      %v275 = vpow.pop %v274
      %v276 = vmul.f32 %v273, 1.442695
      %v277 = vpow.pop %v276
      %v278 = vsub.f32 %v270, %v275
      %v279 = vsub.f32 %v271, %v277
      %v280 = vsub.f32 %v266, %v268
      %v281 = vsub.f32 %v267, %v269
      %v282 = vmul.f32 %v280, 1.442695
      %v283 = vpow.pop %v282
      %v284 = vmul.f32 %v281, 1.442695
      %v285 = vpow.pop %v284
      %v286 = vadd.f32 %v278, %v283
      %v287 = vadd.f32 %v279, %v285
      %v288 = vmax.f32 %v286, 1e-30
      %v289 = vmax.f32 %v287, 1e-30
      %v290 = vlog2.pop %v288
      %v291 = vmul.f32 %v290, 0.6931472
      %v292 = vlog2.pop %v289
      %v293 = vmul.f32 %v292, 0.6931472
      %v294 = vadd.f32 %v268, %v291
      %v295 = vadd.f32 %v269, %v293
      %v296 = vsub.f32 %v294, %v266
      %v297 = vsub.f32 %v295, %v267
      %v298 = vmul.f32 %v238, %v296
      %v299 = vmul.f32 %v239, %v297
      %v300 = vlaneseq
      %v301 = vshrl.u32 %v300, 7
      %v302 = vadd.s32 %v301, 8
      %vm303 = vcmp.eq.s32.totalorder %v301, %v202
      %vm304 = vcmp.eq.s32.totalorder %v302, %v202
      %306 = vset.pattern.permute.xlu0 0
      %307 = vperm.xlu0 %306, %v298
      %v308 = vpop.permute.xlu0 %307
      %311 = vset.pattern.permute.xlu0 0
      %312 = vperm.xlu0 %311, %v299
      %v313 = vpop.permute.xlu0 %312
      %v315 = vsel %vm303, %v308, 0.0
      %v316 = vsel %vm304, %v313, 0.0
      %vm317 = vcmask 130048
      %v318 = vsel %vm317, %v315, 0.0
      %v319 = vsel %vm317, %v316, 0.0
      %v320 = vadd.f32 %v318, %v319
      %v321 = vrot.slane %v320, 4
      %v322 = vadd.f32 %v320, %v321
      %v323 = vrot.slane %v322, 2
      %v324 = vadd.f32 %v322, %v323
      %v325 = vrot.slane %v324, 1
      %v326 = vadd.f32 %v324, %v325
      %vm327 = vcmask 122880
      %328 = vst.msk [vmem:[#allocation9] sm:$0x1] %vm327, %v326
      %330 = vset.pattern.permute.xlu0 0
      %331 = vperm.xlu0 %330, %v238
      %v332 = vpop.permute.xlu0 %331
      %335 = vset.pattern.permute.xlu0 0
      %336 = vperm.xlu0 %335, %v239
      %v337 = vpop.permute.xlu0 %336
      %v339 = vsel %vm303, %v332, 0.0
      %v340 = vsel %vm304, %v337, 0.0
      %v341 = vsel %vm317, %v339, 0.0
      %v342 = vsel %vm317, %v340, 0.0
      %v343 = vadd.f32 %v341, %v342
      %v344 = vrot.slane %v343, 4
      %v345 = vadd.f32 %v343, %v344
      %v346 = vrot.slane %v345, 2
      %v347 = vadd.f32 %v345, %v346
      %v348 = vrot.slane %v347, 1
      %v349 = vadd.f32 %v347, %v348
      %350 = vst.msk [vmem:[#allocation10] sm:$0x1] %vm327, %v349
    $region25: #{tpu_custom_call.1} parent=1 // pred_fallthru
      _
    // Predicated region
    $region26: #{tpu_custom_call.1} parent=1 // pred_check
      _
    $region27: #{tpu_custom_call.1} parent=1 // pred_check_branch
      %352 = sbr.rel (0) target = $region29
    $region28: #{tpu_custom_call.1} parent=1 // pred_region
      %s354 = ssub.s32 16, 16
      %355 = vsyncadd [#allocation8], %s354
      %s357 = sshll.u32 [#allocation9], 4
      %s358 = int_to_ptr.vmem [resolvable:$true] %s357
      %360 = dma.vmem_to_hbm [thread:$0]  %s358, 16, %s3, [#allocation8]
    $region29: #{tpu_custom_call.1} parent=1 // pred_fallthru
      _
    // Predicated region
    $region30: #{tpu_custom_call.1} parent=1 // pred_check
      _
    $region31: #{tpu_custom_call.1} parent=1 // pred_check_branch
      %362 = sbr.rel (0) target = $region33
    $region32: #{tpu_custom_call.1} parent=1 // pred_region
      %s364 = ssub.s32 16, 16
      %365 = vsyncadd [#allocation11], %s364
      %s367 = sshll.u32 [#allocation10], 4
      %s368 = int_to_ptr.vmem [resolvable:$true] %s367
      %370 = dma.vmem_to_hbm [thread:$0]  %s368, 16, %s4, [#allocation11]
    $region33: #{tpu_custom_call.1} parent=1 // pred_fallthru
      _
    // Predicated region
    $region34: #{tpu_custom_call.1} parent=1 // pred_check
      _
    $region35: #{tpu_custom_call.1} parent=1 // pred_check_branch
      %372 = sbr.rel (0) target = $region37
    $region36: #{tpu_custom_call.1} parent=1 // pred_region
      %373 = dma.done [#allocation8], 16
    $region37: #{tpu_custom_call.1} parent=1 // pred_fallthru
      _
    // Predicated region
    $region38: #{tpu_custom_call.1} parent=1 // pred_check
      _
    $region39: #{tpu_custom_call.1} parent=1 // pred_check_branch
      %375 = sbr.rel (0) target = $region41
    $region40: #{tpu_custom_call.1} parent=1 // pred_region
      %376 = dma.done [#allocation11], 16
    $region41: #{tpu_custom_call.1} parent=1 // pred_fallthru
      _
    %377 = vsyncpa [#allocation7], 1
    %378 = vsyncpa [#allocation8], 1
    %379 = vsyncpa [#allocation11], 1

</llo_original>
